<compile_context>
chip_gen: v6e
topology: v6e:2x2x1
jax: 0.10.0
libtpu: 0.0.40
codegen_flags: <defaults>
</compile_context>

<pallas_src>
import jax
import jax.numpy as jnp
from jax import lax
from jax.experimental import pallas as pl
from jax.experimental.pallas import tpu as pltpu

_LANES = 128
_SUBLANES = 8
_MAX_BLOCK_BYTES = 2 * 1024 * 1024      # ~2 MiB blocks: per-step overhead < 5%


def _round_up(a, b):
    return ((a + b - 1) // b) * b


def _vmem_budget_bytes():
    """Per-TensorCore VMEM (128 MiB on v5e/v6e, 64 MiB on v7x)."""
    try:
        return int(pltpu.get_tpu_info().vmem_capacity_bytes)
    except Exception:
        return 64 * 1024 * 1024          # conservative (v7x) fallback


_VMEM_BUDGET = _vmem_budget_bytes()
# Fused path keeps x + 3 outputs (+ f32 temporaries) resident in VMEM.
_FUSED_MAX_BYTES = max(1 << 20, min(_VMEM_BUDGET // 10, 12 << 20))
# Explicit scoped-VMEM limit: 1 in + 3 out, double-buffered 2 MiB blocks
# need ~16 MiB, above v5e's 16 MiB scoped default.
_VMEM_LIMIT_BYTES = max(40 << 20, min(3 * _VMEM_BUDGET // 4, 96 << 20))


# ----------------------------------------------------------------------------
# Fused single-pass kernel (whole array resident in VMEM, one HBM read of x)
# ----------------------------------------------------------------------------
def _fused_kernel(x_ref, x_out_ref, z_new_ref, z_ref):
    x = x_ref[...]
    pred = jnp.sum(x.astype(jnp.float32)) > 0.0
    one = jnp.ones((), dtype=x_out_ref.dtype)
    delta = jnp.where(pred, one, -one)
    zval = jnp.where(pred, one, jnp.zeros((), dtype=x_out_ref.dtype))
    x_out_ref[...] = x + delta
    z_new_ref[...] = jnp.broadcast_to(zval, z_new_ref.shape)
    z_ref[...] = jnp.ones_like(z_ref)


def _fused_forward(x):
    orig_shape = x.shape
    n = x.size
    if n % _LANES == 0:
        xin = x.reshape(n // _LANES, _LANES)     # lane-dense, zero-copy reshape
    else:
        xin = x                                  # full-array block, any rank
    sds = jax.ShapeDtypeStruct(xin.shape, x.dtype)
    x_new, z_new, z = pl.pallas_call(
        _fused_kernel,
        out_shape=(sds, sds, sds),
        compiler_params=pltpu.CompilerParams(
            vmem_limit_bytes=_VMEM_LIMIT_BYTES),
    )(xin)
    return ((x_new.reshape(orig_shape), z_new.reshape(orig_shape)),
            z.reshape(orig_shape))


# ----------------------------------------------------------------------------
# Tiled path, kernel 1: per-core partial sums (grid = (partials, blocks))
# ----------------------------------------------------------------------------
def _partial_sums(slab, rows, block_rows, n_blocks, num_partials):
    """Returns a (num_partials*8, 128) float32 array of partial sums."""
    inner = pl.cdiv(n_blocks, num_partials)
    padded_grid = (num_partials * inner) != n_blocks
    ragged_rows = (rows % block_rows) != 0
    needs_mask = padded_grid or ragged_rows

    def kernel(x_ref, acc_ref):
        i = pl.program_id(1)

        @pl.when(i == 0)
        def _init():
            acc_ref[...] = jnp.zeros_like(acc_ref)

        xb = x_ref[...].astype(jnp.float32)
        if needs_mask:
            # Zero rows past the end of the slab (partial last block and/or
            # redundant grid slots introduced by the per-core split).
            bid = pl.program_id(0) * inner + i
            row0 = bid * block_rows
            rid = lax.broadcasted_iota(jnp.int32, (block_rows, _LANES), 0) + row0
            xb = jnp.where(rid < rows, xb, 0.0)
        # Reduce only along the vreg-major axis: pure VPU adds, no per-step
        # cross-lane XLU work; the final reduce happens once, outside.
        acc_ref[...] += xb.reshape(-1, _SUBLANES, _LANES).sum(axis=0)

    if padded_grid:
        def x_map(c, i):       # clamp redundant trailing slots (masked above)
            return (jnp.minimum(c * inner + i, n_blocks - 1), 0)
    else:
        def x_map(c, i):
            return (c * inner + i, 0)

    return pl.pallas_call(
        kernel,
        out_shape=jax.ShapeDtypeStruct(
            (num_partials * _SUBLANES, _LANES), jnp.float32),
        grid_spec=pltpu.PrefetchScalarGridSpec(
            num_scalar_prefetch=0,
            grid=(num_partials, inner),
            in_specs=[pl.BlockSpec((block_rows, _LANES), x_map)],
            out_specs=pl.BlockSpec((_SUBLANES, _LANES), lambda c, i: (c, 0)),
        ),
        compiler_params=pltpu.CompilerParams(
            dimension_semantics=("parallel", "arbitrary"),
            vmem_limit_bytes=_VMEM_LIMIT_BYTES),
    )(slab)


# ----------------------------------------------------------------------------
# Tiled path, kernel 2: elementwise apply (+ fused ones output)
# ----------------------------------------------------------------------------
def _apply_kernel(pred_ref, x_ref, x_out_ref, z_new_ref, z_ref):
    pred = pred_ref[0] != 0                      # scalar predicate from SMEM
    one = jnp.ones((), dtype=x_out_ref.dtype)
    delta = jnp.where(pred, one, -one)
    zval = jnp.where(pred, one, jnp.zeros((), dtype=x_out_ref.dtype))
    x_out_ref[...] = x_ref[...] + delta
    z_new_ref[...] = jnp.broadcast_to(zval, z_new_ref.shape)
    z_ref[...] = jnp.ones_like(z_ref)            # fused ones_like(x)


def _apply(slab, pred_i32, block_rows, n_blocks, alias_input):
    tile = pl.BlockSpec((block_rows, _LANES), lambda i, p: (i, 0))
    sds = jax.ShapeDtypeStruct(slab.shape, slab.dtype)
    extra = {}
    if alias_input:
        # The slab is a dead temporary (it came from jnp.pad): write x_new in
        # place.  Operand 0 is the scalar-prefetch predicate, slab is 1.
        extra["input_output_aliases"] = {1: 0}
    return pl.pallas_call(
        _apply_kernel,
        out_shape=(sds, sds, sds),
        grid_spec=pltpu.PrefetchScalarGridSpec(
            num_scalar_prefetch=1,
            grid=(n_blocks,),
            in_specs=[tile],
            out_specs=(tile, tile, tile),
        ),
        compiler_params=pltpu.CompilerParams(
            dimension_semantics=("parallel",),   # shards across TCs on v7x
            vmem_limit_bytes=_VMEM_LIMIT_BYTES),
        **extra,
    )(pred_i32, slab)


def _tiled_forward(x):
    orig_shape = x.shape
    dt = x.dtype
    n = x.size

    flat = x.reshape(-1)
    padded = (n % _LANES) != 0
    if padded:
        # TODO(synk): a masked-tail store would avoid this one-time pad copy
        # (and the output slices below) for sizes not divisible by 128.
        flat = jnp.pad(flat, (0, _LANES - n % _LANES))
    rows = flat.shape[0] // _LANES
    slab = flat.reshape(rows, _LANES)            # zero-copy when not padded

    # Block height: multiple of the dtype's native sublane packing
    # (8 for f32, 16 for bf16, 32 for int8/fp8), capped at ~2 MiB blocks.
    sub_mult = max(_SUBLANES, 32 // dt.itemsize)
    max_rows = max(sub_mult,
                   (_MAX_BLOCK_BYTES // (_LANES * dt.itemsize))
                   // sub_mult * sub_mult)
    block_rows = min(max_rows, _round_up(rows, sub_mult))
    n_blocks = pl.cdiv(rows, block_rows)

    # Reduction: 2 resident partials let both v7x TensorCores drive HBM
    # (harmless serial split on single-TC v5e/v6e).
    num_partials = 2 if n_blocks >= 4 else 1
    partials = _partial_sums(slab, rows, block_rows, n_blocks, num_partials)
    # Tiny fused XLA epilogue: cross-lane reduce of the (P*8,128) partials,
    # with the >0 comparison folded into the same op (no extra round trip).
    pred_i32 = (jnp.sum(partials) > 0.0).astype(jnp.int32).reshape(1)

    x_new_s, z_new_s, z_s = _apply(slab, pred_i32, block_rows, n_blocks,
                                   alias_input=padded)

    if padded:
        def unpad(a):
            return a.reshape(-1)[:n].reshape(orig_shape)
        return (unpad(x_new_s), unpad(z_new_s)), unpad(z_s)
    return ((x_new_s.reshape(orig_shape), z_new_s.reshape(orig_shape)),
            z_s.reshape(orig_shape))


# ----------------------------------------------------------------------------
# Host-level entry points
# ----------------------------------------------------------------------------
def cond_model_forward(x):
    """Pallas equivalent of CondModel.forward: ((x_new, z_new), ones_like(x))."""
    if x.size * x.dtype.itemsize <= _FUSED_MAX_BYTES:
        return _fused_forward(x)
    return _tiled_forward(x)


def wrapper_forward(x):
    """Equivalent of Wrapper.forward."""
    return cond_model_forward(x)


wrapper_forward_jit = jax.jit(wrapper_forward)


def _reference(x):
    z = jnp.ones_like(x)
    pred = jnp.sum(x, dtype=jnp.float32) > 0
    x_new = jnp.where(pred, x + 1, x - 1)
    z_new = jnp.where(pred, z, jnp.zeros_like(z))
    return (x_new, z_new), z


if __name__ == "__main__":
    def check(inp):
        (xn, zn), z = wrapper_forward_jit(inp)
        jax.block_until_ready((xn, zn, z))
        (rxn, rzn), rz = _reference(inp)
        assert xn.shape == inp.shape and zn.shape == inp.shape and z.shape == inp.shape
        assert jnp.allclose(xn, rxn), "x_new mismatch"
        assert jnp.allclose(zn, rzn), "z_new mismatch"
        assert jnp.allclose(z, rz), "z mismatch"

    key = jax.random.PRNGKey(0)

    # Small input (2,4,16,16): fused single-pass VMEM-resident kernel.
    x = jax.random.normal(key, (2, 4, 16, 16), dtype=jnp.float32)
    check(x)            # data-dependent branch
    check(x + 10.0)     # force true branch
    check(x - 10.0)     # force false branch

    # Small ragged input (numel % 128 != 0): fused kernel, original-shape block.
    check(jax.random.normal(key, (3, 5, 7), dtype=jnp.float32) - 1.0)

    # Large lane-aligned input: tiled path (per-core partial sums + apply),
    # zero-copy slab (no pad / no slice).
    xl = jax.random.normal(key, (1024, 4096), dtype=jnp.float32)
    check(xl + 0.01)    # force true branch
    check(xl - 0.01)    # force false branch

    # Large ragged input: padded tiled path (masked reduction tail, clamped
    # redundant grid slots, in-place aliased x_new).
    xr = jax.random.normal(key, (2047, 2085), dtype=jnp.float32)
    check(xr + 0.01)

    print("KERNEL_OK")
</pallas_src>

<mosaic_0001>
module attributes {stable_mosaic.version = 11 : i64} {
  func.func @_fused_kernel(%arg0: memref<16x128xf32, #tpu.memory_space<vmem>>, %arg1: memref<16x128xf32, #tpu.memory_space<vmem>>, %arg2: memref<16x128xf32, #tpu.memory_space<vmem>>, %arg3: memref<16x128xf32, #tpu.memory_space<vmem>>) attributes {dimension_semantics = [], scalar_prefetch = 0 : i64, scratch_operands = 0 : i64, tpu.core_type = #tpu.core_type<tc>} {
    %c0 = arith.constant 0 : index
    %c0_0 = arith.constant 0 : index
    %0 = vector.load %arg0[%c0, %c0_0] : memref<16x128xf32, #tpu.memory_space<vmem>>, vector<16x128xf32>
    %1 = vector.shape_cast %0 : vector<16x128xf32> to vector<1x16x128xf32>
    %cst = arith.constant dense<0.000000e+00> : vector<1xf32>
    %2 = vector.multi_reduction <add>, %1, %cst [1, 2] : vector<1x16x128xf32> to vector<1xf32>
    %3 = vector.shape_cast %2 : vector<1xf32> to vector<1x1x1xf32>
    %4 = vector.extract %3[0, 0, 0] : f32 from vector<1x1x1xf32>
    %cst_1 = arith.constant 0.000000e+00 : f32
    %5 = arith.cmpf ogt, %4, %cst_1 : f32
    %cst_2 = arith.constant 0.000000e+00 : f32
    %cst_3 = arith.constant 1.000000e+00 : f32
    %6 = arith.subf %cst_2, %cst_3 : f32
    %cst_4 = arith.constant 1.000000e+00 : f32
    %7 = arith.select %5, %cst_4, %6 : f32
    %cst_5 = arith.constant 1.000000e+00 : f32
    %cst_6 = arith.constant 0.000000e+00 : f32
    %8 = arith.select %5, %cst_5, %cst_6 : f32
    %9 = vector.broadcast %7 : f32 to vector<16x128xf32>
    %10 = arith.addf %0, %9 : vector<16x128xf32>
    %c0_7 = arith.constant 0 : index
    %c0_8 = arith.constant 0 : index
    %11 = vector.load %arg1[%c0_7, %c0_8] : memref<16x128xf32, #tpu.memory_space<vmem>>, vector<16x128xf32>
    tpu.vector_store %arg1[%c0_7, %c0_8], %10 {strides = array<i32>} : memref<16x128xf32, #tpu.memory_space<vmem>>, vector<16x128xf32>,
    %12 = vector.broadcast %8 : f32 to vector<16x128xf32>
    %c0_9 = arith.constant 0 : index
    %c0_10 = arith.constant 0 : index
    %13 = vector.load %arg2[%c0_9, %c0_10] : memref<16x128xf32, #tpu.memory_space<vmem>>, vector<16x128xf32>
    tpu.vector_store %arg2[%c0_9, %c0_10], %12 {strides = array<i32>} : memref<16x128xf32, #tpu.memory_space<vmem>>, vector<16x128xf32>,
    %cst_11 = arith.constant 1.000000e+00 : f32
    %14 = vector.broadcast %cst_11 : f32 to vector<16x128xf32>
    %c0_12 = arith.constant 0 : index
    %c0_13 = arith.constant 0 : index
    %15 = vector.load %arg3[%c0_12, %c0_13] : memref<16x128xf32, #tpu.memory_space<vmem>>, vector<16x128xf32>
    tpu.vector_store %arg3[%c0_12, %c0_13], %14 {strides = array<i32>} : memref<16x128xf32, #tpu.memory_space<vmem>>, vector<16x128xf32>,
    return
  }
}

</mosaic_0001>

<llo_original>
// kernel: wrapper_forward.1
$region0: #{wrapper_forward.1}
  #allocation0 [shape = 'u32[]', space=smem, size = 0x4, offset = 0x4, fixed_abs, tag = 'smem constant byte address 0x4 - core index']
  #allocation1 [shape = 'u32[144,128]{1,0:T(1,128)}', space=vmem, size = 0x12000, scoped, tag = 'internal scratch']
  %s0 = inlined_call_operand.vmem [shape: f32[16,128], index: 0, kind: input, shape index: {}]
  %s1 = inlined_call_operand.vmem [shape: f32[16,128], index: 1, kind: output, shape index: {0}]
  %s2 = inlined_call_operand.vmem [shape: f32[16,128], index: 2, kind: output, shape index: {1}]
  %s3 = inlined_call_operand.vmem [shape: f32[16,128], index: 3, kind: output, shape index: {2}]
  %4 = xla_tuple %s1, %s2, %s3
  %s5 = sld [smem:[#allocation0]]
  $region30: #{wrapper_forward.1} parent=0
    _
  %s7 = ssub.s32 1, %s5
  %s8 = scalar_select 0, %s7, %s5
  // Predicated region
  $region2: #{wrapper_forward.1} parent=0 // pred_check
    _
  $region3: #{wrapper_forward.1} parent=0 // pred_check_branch
    %10 = sbr.rel (0) target = $region5
  $region4: #{wrapper_forward.1} parent=0 // pred_region
    _
  $region5: #{wrapper_forward.1} parent=0 // pred_fallthru
    _
  %v11 = vld [vmem:[%s0] sm:$0xff]
  %v12 = vld [vmem:[%s0 + $0x8] sm:$0xff]
  %v13 = vadd.f32 %v11, %v12
  %14 = vadd.xlane.f32.xlu0 %v13
  %v15 = vpop.xlane.xlu0 %14
  %v16 = vrot.slane %v15, 4
  %v17 = vadd.f32 %v15, %v16
  %v18 = vrot.slane %v17, 2
  %v19 = vadd.f32 %v17, %v18
  %v20 = vrot.slane %v19, 1
  %v21 = vadd.f32 %v19, %v20
  %s22 = vtos %v21
  %p23 = scmp.gt.f32.partialorder %s22, 0.0
  %s24 = scalar_select %p23, 1.0, -1.0
  %s25 = scalar_select %p23, 1.0, 0.0
  %v26 = vstv %s24
  %v27 = vadd.f32 %v11, %v26
  %v28 = vadd.f32 %v12, %v26
  %29 = vst [vmem:[%s1] sm:$0xff] %v27
  %30 = vst [vmem:[%s1 + $0x8] sm:$0xff] %v28
  %v31 = vstv %s25
  %32 = vst [vmem:[%s2] sm:$0xff] %v31
  %33 = vst [vmem:[%s2 + $0x8] sm:$0xff] %v31
  %34 = vst [vmem:[%s3] sm:$0xff] 1.0
  %35 = vst [vmem:[%s3 + $0x8] sm:$0xff] 1.0
  // Predicated region
  $region6: #{wrapper_forward.1} parent=0 // pred_check
    _
  $region7: #{wrapper_forward.1} parent=0 // pred_check_branch
    %37 = sbr.rel (0) target = $region9
  $region8: #{wrapper_forward.1} parent=0 // pred_region
    _
  $region9: #{wrapper_forward.1} parent=0 // pred_fallthru
    _
  // Predicated region
  $region10: #{wrapper_forward.1} parent=0 // pred_check
    _
  $region11: #{wrapper_forward.1} parent=0 // pred_check_branch
    %39 = sbr.rel (0) target = $region13
  $region12: #{wrapper_forward.1} parent=0 // pred_region
    _
  $region13: #{wrapper_forward.1} parent=0 // pred_fallthru
    _
  // Predicated region
  $region14: #{wrapper_forward.1} parent=0 // pred_check
    _
  $region15: #{wrapper_forward.1} parent=0 // pred_check_branch
    %41 = sbr.rel (0) target = $region17
  $region16: #{wrapper_forward.1} parent=0 // pred_region
    _
  $region17: #{wrapper_forward.1} parent=0 // pred_fallthru
    _
  // Predicated region
  $region18: #{wrapper_forward.1} parent=0 // pred_check
    _
  $region19: #{wrapper_forward.1} parent=0 // pred_check_branch
    %43 = sbr.rel (0) target = $region21
  $region20: #{wrapper_forward.1} parent=0 // pred_region
    _
  $region21: #{wrapper_forward.1} parent=0 // pred_fallthru
    _
  // Predicated region
  $region22: #{wrapper_forward.1} parent=0 // pred_check
    _
  $region23: #{wrapper_forward.1} parent=0 // pred_check_branch
    %45 = sbr.rel (0) target = $region25
  $region24: #{wrapper_forward.1} parent=0 // pred_region
    _
  $region25: #{wrapper_forward.1} parent=0 // pred_fallthru
    _
  // Predicated region
  $region26: #{wrapper_forward.1} parent=0 // pred_check
    _
  $region27: #{wrapper_forward.1} parent=0 // pred_check_branch
    %47 = sbr.rel (0) target = $region29
  $region28: #{wrapper_forward.1} parent=0 // pred_region
    _
  $region29: #{wrapper_forward.1} parent=0 // pred_fallthru
    _

</llo_original>
